<compile_context>
chip_gen: v7x
topology: tpu7x:2x2x1
jax: 0.10.0
libtpu: 0.0.40
codegen_flags: <defaults>
</compile_context>

<pallas_src>
import jax
import jax.numpy as jnp
from jax.experimental import pallas as pl
from jax.experimental.pallas import tpu as pltpu


def simple_nn_kernel(x_ref, w1_ref, b1_ref, w2_ref, b2_ref, o_ref):
    # x_ref:  (Din, TB) feature-major tile, batch on the lane axis (bf16 or f32)
    # w1_ref: (H, Din)  fc1 weight, PyTorch (out, in) layout (same dtype as x)
    # b1_ref: (H, 1)    fc1 bias column, f32 (broadcasts along lanes)
    # w2_ref: (H, 1)    fc2 weight column, f32
    # b2_ref: (1, 1)    fc2 bias scalar, f32, in SMEM
    # o_ref:  (1, TB)   lane-dense f32 output tile
    h = jnp.dot(w1_ref[...], x_ref[...],
                preferred_element_type=jnp.float32)              # (H, TB)  MXU
    h = jnp.maximum(h + b1_ref[...], 0.0)                        # bias + ReLU (VPU, f32)

    # fc2: K=5, N=1 contraction -> VPU broadcast-mul + tiny sublane reduce
    # (cheaper than a second MXU fill/drain for ~5 MACs per sample).
    y = jnp.sum(w2_ref[...] * h, axis=0, keepdims=True) + b2_ref[0, 0]   # (1, TB)

    # sigmoid(y) == 0.5 * (1 + tanh(y/2)): one EUP push, exact.
    o_ref[...] = 0.5 * (1.0 + jnp.tanh(0.5 * y))


def _round_up(n, m):
    return ((n + m - 1) // m) * m


def _tile_vmem_bytes(tb, x_itemsize):
    # Double-buffered, sublane-padded VMEM footprint of the per-step tiles:
    #   x tile (Din=10, tb) pads to 16 sublanes (both f32 (8,128) and bf16 (16,128) tiling),
    #   out tile (1, tb) f32 pads to 8 sublanes.
    return 2 * (16 * tb * x_itemsize + 8 * tb * 4)


def simple_nn_forward(x, w1, b1, w2, b2, *, block_b=128 * 1024,
                      compute_dtype=jnp.bfloat16, x_feature_major=False):
    """Fused SimpleNN forward.

    Args (PyTorch nn.Linear layouts):
      x:  (B, 10) float32   (or (10, B) if x_feature_major=True)
      w1: (5, 10), b1: (5,)   -- fc1
      w2: (1, 5),  b2: (1,)   -- fc2
    Returns: (B, 1) float32, sigmoid(relu(x @ w1.T + b1) @ w2.T + b2)
    """
    if x_feature_major:
        Din, B = x.shape
    else:
        B, Din = x.shape
    H = w1.shape[0]
    Dout = w2.shape[0]
    itemsize = jnp.dtype(compute_dtype).itemsize

    # --- Batch tiling: pad only to a multiple of 128, near-even tiles, >=2
    #     grid steps when possible (so both v7x TensorCores get work). ---
    b128 = _round_up(max(B, 1), 128)
    tb = min(_round_up(block_b, 128), b128)
    n_tiles = -(-b128 // tb)
    if n_tiles == 1 and b128 >= 256:
        n_tiles = 2
    tb = _round_up(-(-b128 // n_tiles), 128)
    # Keep the double-buffered footprint comfortably under v7x's 64 MiB VMEM.
    while tb > 128 and _tile_vmem_bytes(tb, itemsize) > (48 << 20):
        tb = _round_up((tb + 1) // 2, 128)
        n_tiles = -(-b128 // tb)
    b_pad = n_tiles * tb

    # --- Feature-major x: cast + transpose + minimal pad fused into ONE pass.
    #     (If the caller already has (Din, B) activations, only cast/pad.) ---
    x_fm = x.astype(compute_dtype) if x_feature_major else x.astype(compute_dtype).T
    if b_pad != B:
        x_fm = jnp.pad(x_fm, ((0, 0), (0, b_pad - B)))

    w1_c = w1.astype(compute_dtype)                      # (H, Din)  -> MXU operand dtype
    b1_col = b1.reshape(H, 1).astype(jnp.float32)        # (H, 1)
    w2_col = w2.reshape(Dout, H).T.astype(jnp.float32)   # (H, 1)
    b2_s = b2.reshape(1, 1).astype(jnp.float32)          # (1, 1) -> SMEM scalar

    vmem_limit = max(_tile_vmem_bytes(tb, itemsize) + (8 << 20), 32 << 20)
    vmem_limit = min(vmem_limit, 60 << 20)               # stay under v7x physical 64 MiB

    weight_bytes = (w1_c.size * itemsize) + (H + H + 1) * 4
    cost = pl.CostEstimate(
        flops=2 * b_pad * (Din * H + H * Dout),
        transcendentals=b_pad,                            # one tanh per sample
        bytes_accessed=b_pad * Din * itemsize + b_pad * Dout * 4 + weight_bytes,
    )

    out_fm = pl.pallas_call(
        simple_nn_kernel,
        out_shape=jax.ShapeDtypeStruct((Dout, b_pad), jnp.float32),
        grid=(n_tiles,),
        in_specs=[
            # x: tiled along the (lane) batch axis, double-buffered per grid step.
            pl.BlockSpec((Din, tb), lambda i: (0, i)),
            # Weights / biases: constant index_map -> resident in VMEM across steps.
            pl.BlockSpec((H, Din), lambda i: (0, 0)),
            pl.BlockSpec((H, 1), lambda i: (0, 0)),
            pl.BlockSpec((H, 1), lambda i: (0, 0)),
            # b2: scalar in SMEM.
            pl.BlockSpec(memory_space=pltpu.MemorySpace.SMEM),
        ],
        out_specs=pl.BlockSpec((Dout, tb), lambda i: (0, i)),
        compiler_params=pltpu.CompilerParams(
            dimension_semantics=("parallel",),   # shard batch across TCs on v7x
            vmem_limit_bytes=vmem_limit,
        ),
        cost_estimate=cost,
    )(x_fm, w1_c, b1_col, w2_col, b2_s)

    # Back to the PyTorch (B, 1) convention; drop batch padding.
    return out_fm[:, :B].T


def reference_forward(x, w1, b1, w2, b2):
    h = jnp.maximum(x @ w1.T + b1, 0.0)
    return jax.nn.sigmoid(h @ w2.T + b2)


if __name__ == "__main__":
    key = jax.random.PRNGKey(0)
    kx, k1, kb1, k2, kb2 = jax.random.split(key, 5)

    B, Din, H, Dout = 8, 10, 5, 1

    # Deterministic inputs / params (PyTorch nn.Linear layouts).
    x = jax.random.normal(kx, (B, Din), dtype=jnp.float32)
    w1 = jax.random.uniform(k1, (H, Din), jnp.float32, -0.3, 0.3)
    b1 = jax.random.uniform(kb1, (H,), jnp.float32, -0.3, 0.3)
    w2 = jax.random.uniform(k2, (Dout, H), jnp.float32, -0.4, 0.4)
    b2 = jax.random.uniform(kb2, (Dout,), jnp.float32, -0.4, 0.4)

    ref = reference_forward(x, w1, b1, w2, b2)

    # 1) Default fast path: bf16 MXU stream, f32 accumulation / tail.
    out = jax.block_until_ready(simple_nn_forward(x, w1, b1, w2, b2))
    assert out.shape == (B, Dout), out.shape
    assert jnp.allclose(out, ref, atol=1e-2, rtol=1e-2), (out, ref)

    # 2) Pure-f32 validation mode (tight tolerance).
    out_f32 = jax.block_until_ready(
        simple_nn_forward(x, w1, b1, w2, b2, compute_dtype=jnp.float32))
    assert jnp.allclose(out_f32, ref, atol=1e-3, rtol=1e-3), (out_f32, ref)

    # 3) Multi-tile grid path (padding + 2 grid steps / both v7x TCs).
    xb = jax.random.normal(kx, (300, Din), dtype=jnp.float32)
    out_b = jax.block_until_ready(simple_nn_forward(xb, w1, b1, w2, b2))
    ref_b = reference_forward(xb, w1, b1, w2, b2)
    assert out_b.shape == (300, Dout), out_b.shape
    assert jnp.allclose(out_b, ref_b, atol=1e-2, rtol=1e-2), (out_b, ref_b)

    print("KERNEL_OK")
</pallas_src>

<mosaic_0001>
module attributes {stable_mosaic.version = 11 : i64} {
  func.func @simple_nn_kernel(%arg0: i32, %arg1: memref<10x128xbf16, #tpu.memory_space<vmem>>, %arg2: memref<5x10xbf16, #tpu.memory_space<vmem>>, %arg3: memref<5x1xf32, #tpu.memory_space<vmem>>, %arg4: memref<5x1xf32, #tpu.memory_space<vmem>>, %arg5: memref<1x1xf32, #tpu.memory_space<smem>>, %arg6: memref<1x128xf32, #tpu.memory_space<vmem>>) attributes {dimension_semantics = [#tpu.dimension_semantics<parallel>], iteration_bounds = array<i64: 1>, scalar_prefetch = 0 : i64, scratch_operands = 0 : i64, tpu.core_type = #tpu.core_type<tc>, window_params = [{transform_indices = @transform_0, window_bounds = array<i64: 10, 128>}, {pipeline_mode = #tpu.pipeline_mode<synchronous>, transform_indices = @transform_1, window_bounds = array<i64: 5, 10>}, {pipeline_mode = #tpu.pipeline_mode<synchronous>, transform_indices = @transform_2, window_bounds = array<i64: 5, 1>}, {pipeline_mode = #tpu.pipeline_mode<synchronous>, transform_indices = @transform_3, window_bounds = array<i64: 5, 1>}, {transform_indices = @transform_4, window_bounds = array<i64: 1, 1>}, {transform_indices = @transform_5, window_bounds = array<i64: 1, 128>}]} {
    %c0 = arith.constant 0 : index
    %c0_0 = arith.constant 0 : index
    %0 = vector.load %arg2[%c0, %c0_0] : memref<5x10xbf16, #tpu.memory_space<vmem>>, vector<5x10xbf16>
    %c0_1 = arith.constant 0 : index
    %c0_2 = arith.constant 0 : index
    %1 = vector.load %arg1[%c0_1, %c0_2] : memref<10x128xbf16, #tpu.memory_space<vmem>>, vector<10x128xbf16>
    %cst = arith.constant dense<0.000000e+00> : vector<5x128xf32>
    %2 = tpu.matmul %0, %1, %cst {dimension_numbers = #tpu.dot_dimension_numbers<[1], [0], [0], [1], [0, 0, 1, 1], [], []>} : vector<5x10xbf16>, vector<10x128xbf16>, vector<5x128xf32> -> vector<5x128xf32>
    %c0_3 = arith.constant 0 : index
    %c0_4 = arith.constant 0 : index
    %3 = vector.load %arg3[%c0_3, %c0_4] : memref<5x1xf32, #tpu.memory_space<vmem>>, vector<5x1xf32>
    %4 = vector.broadcast %3 : vector<5x1xf32> to vector<5x128xf32>
    %5 = arith.addf %2, %4 : vector<5x128xf32>
    %cst_5 = arith.constant 0.000000e+00 : f32
    %6 = vector.broadcast %cst_5 : f32 to vector<5x128xf32>
    %7 = arith.maximumf %5, %6 : vector<5x128xf32>
    %c0_6 = arith.constant 0 : index
    %c0_7 = arith.constant 0 : index
    %8 = vector.load %arg4[%c0_6, %c0_7] : memref<5x1xf32, #tpu.memory_space<vmem>>, vector<5x1xf32>
    %9 = vector.broadcast %8 : vector<5x1xf32> to vector<5x128xf32>
    %10 = arith.mulf %9, %7 : vector<5x128xf32>
    %cst_8 = arith.constant dense<0.000000e+00> : vector<128xf32>
    %11 = vector.multi_reduction <add>, %10, %cst_8 [0] : vector<5x128xf32> to vector<128xf32>
    %12 = vector.shape_cast %11 : vector<128xf32> to vector<1x128xf32>
    %c0_9 = arith.constant 0 : index
    %c0_10 = arith.constant 0 : index
    %13 = memref.load %arg5[%c0_9, %c0_10] : memref<1x1xf32, #tpu.memory_space<smem>>
    %14 = vector.broadcast %13 : f32 to vector<1x128xf32>
    %15 = arith.addf %12, %14 : vector<1x128xf32>
    %cst_11 = arith.constant 5.000000e-01 : f32
    %16 = vector.broadcast %cst_11 : f32 to vector<1x128xf32>
    %17 = arith.mulf %16, %15 : vector<1x128xf32>
    %18 = math.tanh %17 : vector<1x128xf32>
    %cst_12 = arith.constant 1.000000e+00 : f32
    %19 = vector.broadcast %cst_12 : f32 to vector<1x128xf32>
    %20 = arith.addf %19, %18 : vector<1x128xf32>
    %cst_13 = arith.constant 5.000000e-01 : f32
    %21 = vector.broadcast %cst_13 : f32 to vector<1x128xf32>
    %22 = arith.mulf %21, %20 : vector<1x128xf32>
    %c0_14 = arith.constant 0 : index
    %c0_15 = arith.constant 0 : index
    %23 = vector.load %arg6[%c0_14, %c0_15] : memref<1x128xf32, #tpu.memory_space<vmem>>, vector<1x128xf32>
    tpu.vector_store %arg6[%c0_14, %c0_15], %22 {strides = array<i32>} : memref<1x128xf32, #tpu.memory_space<vmem>>, vector<1x128xf32>,
    return
  }
  func.func @transform_0(%arg0: i32) -> (i32, i32) {
    %c0_i32 = arith.constant 0 : i32
    %c0_i32_0 = arith.constant 0 : i32
    return %c0_i32, %arg0 : i32, i32
  }
  func.func @transform_1(%arg0: i32) -> (i32, i32) {
    %c0_i32 = arith.constant 0 : i32
    %c0_i32_0 = arith.constant 0 : i32
    %c0_i32_1 = arith.constant 0 : i32
    return %c0_i32, %c0_i32_0 : i32, i32
  }
  func.func @transform_2(%arg0: i32) -> (i32, i32) {
    %c0_i32 = arith.constant 0 : i32
    %c0_i32_0 = arith.constant 0 : i32
    %c0_i32_1 = arith.constant 0 : i32
    return %c0_i32, %c0_i32_0 : i32, i32
  }
  func.func @transform_3(%arg0: i32) -> (i32, i32) {
    %c0_i32 = arith.constant 0 : i32
    %c0_i32_0 = arith.constant 0 : i32
    %c0_i32_1 = arith.constant 0 : i32
    return %c0_i32, %c0_i32_0 : i32, i32
  }
  func.func @transform_4(%arg0: i32) -> (i32, i32) {
    %c0_i32 = arith.constant 0 : i32
    %c0_i32_0 = arith.constant 0 : i32
    %c0_i32_1 = arith.constant 0 : i32
    return %c0_i32, %c0_i32_0 : i32, i32
  }
  func.func @transform_5(%arg0: i32) -> (i32, i32) {
    %c0_i32 = arith.constant 0 : i32
    %c0_i32_0 = arith.constant 0 : i32
    return %c0_i32, %arg0 : i32, i32
  }
}

</mosaic_0001>

<llo_original>
// kernel: tpu_custom_call.1
$region0: #{tpu_custom_call.1}
  #allocation0 [shape = 'u32[]', space=smem, size = 0x4, offset = 0x4, fixed_abs, tag = 'smem constant byte address 0x4 - core index']
  #allocation1 [shape = 'u32[144,128]{1,0:T(1,128)}', space=vmem, size = 0x12000, scoped, tag = 'internal scratch']
  #allocation2 [shape = 'f32[1,1]{1,0:T(1,128)S(6)}', space=smem, size = 0x200, scoped, tag = 'scoped memory for tpu_custom_call.1']
  %s0 = inlined_call_operand.vmem [shape: bf16[10,128], index: 0, kind: input, shape index: {}]
  %s1 = inlined_call_operand.vmem [shape: bf16[5,10], index: 1, kind: input, shape index: {}]
  %s2 = inlined_call_operand.vmem [shape: f32[5,1], index: 2, kind: input, shape index: {}]
  %s3 = inlined_call_operand.vmem [shape: f32[5,1], index: 3, kind: input, shape index: {}]
  %s4 = inlined_call_operand.<no memory space> [shape: f32[1,1], index: 4, kind: input, shape index: {}]
  %s5 = inlined_call_operand.hbm [shape: f32[1,128], index: 5, kind: output, shape index: {}]
  %s6 = sld [smem:[#allocation0]]
  $region30: #{tpu_custom_call.1} parent=0
    _
  %s8 = ssub.s32 1, %s6
  %s9 = scalar_select 0, %s8, %s6
  %10 = sst [smem:[#allocation2]] %s4
  $region1: #{tpu_custom_call.1} parent=0
    #allocation3 [shape = 'u8[512]{0}', space=vmem, size = 0x400, scoped, tag = 'output window, operand 0, single buffered']
    #allocation4 [shape = 's32[1]{0}', space=sflag, size = 0x4, scoped, tag = 'scoped memory for tpu_custom_call.1']
    %11 = vsyncpa [#allocation4], 0
    // Predicated region
    $region2: #{tpu_custom_call.1} parent=1 // pred_check
      _
    $region3: #{tpu_custom_call.1} parent=1 // pred_check_branch
      %13 = sbr.rel (0) target = $region5
    $region4: #{tpu_custom_call.1} parent=1 // pred_region
      _
    $region5: #{tpu_custom_call.1} parent=1 // pred_fallthru
      _
    // Predicated region
    $region6: #{tpu_custom_call.1} parent=1 // pred_check
      _
    $region7: #{tpu_custom_call.1} parent=1 // pred_check_branch
      %15 = sbr.rel (0) target = $region9
    $region8: #{tpu_custom_call.1} parent=1 // pred_region
      _
    $region9: #{tpu_custom_call.1} parent=1 // pred_fallthru
      _
    // Predicated region
    $region10: #{tpu_custom_call.1} parent=1 // pred_check
      _
    $region11: #{tpu_custom_call.1} parent=1 // pred_check_branch
      %17 = sbr.rel (0) target = $region13
    $region12: #{tpu_custom_call.1} parent=1 // pred_region
      _
    $region13: #{tpu_custom_call.1} parent=1 // pred_fallthru
      _
    // Predicated region
    $region14: #{tpu_custom_call.1} parent=1 // pred_check
      _
    $region15: #{tpu_custom_call.1} parent=1 // pred_check_branch
      %19 = sbr.rel (0) target = $region17
    $region16: #{tpu_custom_call.1} parent=1 // pred_region
      _
    $region17: #{tpu_custom_call.1} parent=1 // pred_fallthru
      _
    // Predicated region
    $region18: #{tpu_custom_call.1} parent=1 // pred_check
      _
    $region19: #{tpu_custom_call.1} parent=1 // pred_check_branch
      %21 = sbr.rel (0) target = $region21
    $region20: #{tpu_custom_call.1} parent=1 // pred_region
      _
    $region21: #{tpu_custom_call.1} parent=1 // pred_fallthru
      _
    %v23 = vld [vmem:[%s1] sm:$0x7]
    %v24 = vld [vmem:[%s0] sm:$0xf]
    %v25 = vld [vmem:[%s0 + $0x4] sm:$0x1]
    %v26 = vld [vmem:[%s2] sm:$0x1f]
    %28 = vset.pattern.permute.xlu0 0
    %29 = vperm.xlu0 %28, %v26
    %v30 = vpop.permute.xlu0 %29
    %v34 = vunpack.c.l.b16 %v24
    %v35 = vunpack.c.l.b16 %v25
    %v36 = vpack.c.b16 %v35, %v34
    %vm37 = vcmask 80896
    %v39 = vsel %vm37, %v23, 0
    %vm41 = vcmask 1044480
    %v43 = vsel %vm41, %v36, 0
    %45 = vmatprep.subr.bf16.mxu0 0
    %46 = vmatpush1.bf16.msra.mxu0 %v43
    %47 = vmatprep.subr.bf16.mxu0 0
    %48 = vmatpush1.bf16.msra.mxu0 0
    %49 = vmatprep.subr.bf16.mxu0 0
    %50 = vmatpush1.bf16.msra.mxu0 0
    %51 = vmatprep.subr.bf16.mxu0 0
    %52 = vmatpush1.bf16.msra.mxu0 0
    %53 = vmatprep.subr.bf16.mxu0 0
    %54 = vmatpush1.bf16.msra.mxu0 0
    %55 = vmatprep.subr.bf16.mxu0 0
    %56 = vmatpush1.bf16.msra.mxu0 0
    %57 = vmatprep.subr.bf16.mxu0 0
    %58 = vmatpush1.bf16.msra.mxu0 0
    %59 = vmatprep.subr.bf16.mxu0 0
    %60 = vmatpush1.bf16.msra.mxu0 0
    %61 = vmatprep.subr.bf16.mxu0 0
    %62 = vmatpush1.bf16.msra.mxu0 0
    %63 = vmatprep.subr.bf16.mxu0 0
    %64 = vmatpush1.bf16.msra.mxu0 0
    %65 = vmatprep.subr.bf16.mxu0 0
    %66 = vmatpush1.bf16.msra.mxu0 0
    %67 = vmatprep.subr.bf16.mxu0 0
    %68 = vmatpush1.bf16.msra.mxu0 0
    %69 = vmatprep.subr.bf16.mxu0 0
    %70 = vmatpush1.bf16.msra.mxu0 0
    %71 = vmatprep.subr.bf16.mxu0 0
    %72 = vmatpush1.bf16.msra.mxu0 0
    %73 = vmatprep.subr.bf16.mxu0 0
    %74 = vmatpush1.bf16.msra.mxu0 0
    %75 = vmatprep.subr.bf16.mxu0 0
    %76 = vmatpush1.bf16.msra.mxu0 0
    %77 = vmatprep.mubr.bf16.mxu0 0
    %78 = vmatmul.mubr.bf16.gmra.mrb[0].mxu0 %v39
    %v79 = vpop.f32.mrb[0].mxu0
    %v80 = vadd.f32 %v30, %v79
    %v81 = vpop.f32.mrb[0].mxu0
    %v82 = vpop.f32.mrb[0].mxu0
    %v83 = vpop.f32.mrb[0].mxu0
    %84 = vdwg.mxu0
    %v85 = vmax.f32 %v80, 0.0
    %v86 = vld [vmem:[%s3] sm:$0x1f]
    %88 = vset.pattern.permute.xlu0 0
    %89 = vperm.xlu0 %88, %v86
    %v90 = vpop.permute.xlu0 %89
    %v92 = vmul.f32 %v90, %v85
    %v93 = vsel %vm41, %v92, 0.0
    %v94 = vrot.slane %v93, 4
    %v95 = vadd.f32 %v93, %v94
    %v96 = vrot.slane %v95, 2
    %v97 = vadd.f32 %v95, %v96
    %v98 = vrot.slane %v97, 1
    %v99 = vadd.f32 %v97, %v98
    %s100 = sld [smem:[#allocation2]]
    %v101 = vstv %s100
    %v102 = vadd.f32 %v99, %v101
    %v103 = vmul.f32 %v102, 0.5
    %v104 = vtanh.pop %v103
    %v105 = vadd.f32 %v104, 1.0
    %v106 = vmul.f32 %v105, 0.5
    %107 = vst [vmem:[#allocation3] sm:$0x1] %v106
    // Predicated region
    $region22: #{tpu_custom_call.1} parent=1 // pred_check
      _
    $region23: #{tpu_custom_call.1} parent=1 // pred_check_branch
      %109 = sbr.rel (0) target = $region25
    $region24: #{tpu_custom_call.1} parent=1 // pred_region
      %s111 = ssub.s32 16, 16
      %112 = vsyncadd [#allocation4], %s111
      %s114 = sshll.u32 [#allocation3], 4
      %s115 = int_to_ptr.vmem [resolvable:$true] %s114
      %117 = dma.vmem_to_hbm [thread:$0]  %s115, 16, %s5, [#allocation4]
    $region25: #{tpu_custom_call.1} parent=1 // pred_fallthru
      _
    // Predicated region
    $region26: #{tpu_custom_call.1} parent=1 // pred_check
      _
    $region27: #{tpu_custom_call.1} parent=1 // pred_check_branch
      %119 = sbr.rel (0) target = $region29
    $region28: #{tpu_custom_call.1} parent=1 // pred_region
      %120 = dma.done [#allocation4], 16
    $region29: #{tpu_custom_call.1} parent=1 // pred_fallthru
      _
    %121 = vsyncpa [#allocation4], 1

</llo_original>
